<compile_context>
chip_gen: v7x
topology: tpu7x:2x2x1
jax: 0.10.0
libtpu: 0.0.40
codegen_flags: <defaults>
</compile_context>

<pallas_src>
import functools

import jax
import jax.numpy as jnp
from jax.experimental import pallas as pl
from jax.experimental.pallas import tpu as pltpu


def graph_feature_kernel(x_ref, w_ref, b_ref, o_ref, *, n_node, hidden):
    # x_ref: (TB*N, D) f32   w_ref: (D, 2H) bf16   b_ref: (1, 2H) f32   o_ref: (TB, H) f32
    rows = x_ref.shape[0]
    tb = rows // n_node

    # Cast to bf16 in VMEM (x is read from HBM exactly once, as f32) and run both
    # linear layers as ONE fused (rows, D) x (D, 2H) matmul; f32 MXU accumulation.
    x = x_ref[...].astype(jnp.bfloat16)
    z = jnp.dot(x, w_ref[...], preferred_element_type=jnp.float32)
    z = z + b_ref[...]                                               # (rows, 2H) f32

    # Gate split at lane `hidden`: z[:, hidden:] costs one lane-rotate per vreg,
    # which lands on the otherwise-idle XLU slot.  All post-matmul math stays f32
    # (v5e's VPU/EUP have no bf16 path).
    gated = jax.nn.sigmoid(z[:, :hidden]) * jnp.tanh(z[:, hidden:])  # (rows, H) f32

    # Per-graph node sum: splitting the second-to-minor dim is layout-preserving
    # (n_node=8 matches the f32 sublane tile), so this stays an in-vreg sublane
    # reduction with no VMEM round trip.
    pooled = gated.reshape(tb, n_node, hidden).sum(axis=1)           # (TB, H)
    o_ref[...] = jnp.tanh(pooled).astype(o_ref.dtype)


def _graph_feature_xla(x, wi, bi, wj, bj):
    zi = jnp.einsum("bnd,dh->bnh", x, wi) + bi
    zj = jnp.einsum("bnd,dh->bnh", x, wj) + bj
    return jnp.tanh((jax.nn.sigmoid(zi) * jnp.tanh(zj)).sum(axis=1))


def _choose_block_b(batch, n_node, target_rows=4096):
    """~4096 matmul rows per grid step; multiple of 8; >=2 tiles when B is big."""
    bb = max(1, target_rows // max(1, n_node))
    bb = ((min(bb, batch) + 7) // 8) * 8          # sublane / bf16-pack alignment
    if batch > 16:
        # At least two grid steps so the "parallel" batch axis can shard across
        # both TensorCores on v7x (v5e/v6e have a single TC - no effect there).
        bb = min(bb, ((pl.cdiv(batch, 2) + 7) // 8) * 8)
    # Never exceed the batch: a single tile then has block == full array dims;
    # otherwise bb is a multiple of 8 and Pallas pads the ragged last tile
    # (OOB reads -> garbage graphs, OOB output rows -> dropped writes).
    return max(1, min(bb, batch))


def graph_feature(x, wi, bi, wj, bj, *, block_b=None, use_pallas=None):
    """x: [B, N, D_in]; wi/wj: [D_in, H]; bi/bj: [1, H] -> [B, H] float32."""
    B, N, D = x.shape
    H = wi.shape[1]
    x = x.astype(jnp.float32)

    if use_pallas is None:
        # A single tiny tile is pure dispatch overhead -- let XLA fuse it.
        use_pallas = B * N >= 256
    if not use_pallas:
        return _graph_feature_xla(x, wi, bi, wj, bj)

    if block_b is None:
        block_b = _choose_block_b(B, N)
    block_b = max(1, min(block_b, B))
    num_tiles = pl.cdiv(B, block_b)
    rows_per_tile = block_b * N

    # Fuse the two linear layers: one (D, 2H) bf16 weight / one (1, 2H) f32 bias.
    # (Tiny one-off op; in a real model this fold happens at parameter load.)
    w = jnp.concatenate([wi, wj], axis=1).astype(jnp.bfloat16)       # (D, 2H)
    b = jnp.concatenate([bi, bj], axis=1).astype(jnp.float32)        # (1, 2H)

    # Free row-major reshape; the kernel sees 2-D rows. No wrapper cast / pad.
    x_flat = x.reshape(B * N, D)

    # VMEM budget at block_b=512 (N=8, D=36, H=32):
    #   x tile:   4096 x 128(lane-padded) x 4B x 2 bufs ~= 4.0 MiB
    #   z/gated/bf16 intermediates                      ~= 5-6 MiB
    #   out tile:  512 x 128(lane-padded) x 4B x 2 bufs ~= 0.5 MiB
    # ~= 11 MiB peak -> comfortably inside the 32 MiB limit below on every
    # generation (v7x: 64 MiB physical; v5e/v6e: 128 MiB physical).
    cost = pl.CostEstimate(
        flops=4 * B * N * D * H,                       # (B*N, D) x (D, 2H) MACs
        transcendentals=2 * B * N * H + B * H,         # sigmoid + tanh gates + final tanh
        bytes_accessed=x_flat.size * 4 + w.size * 2 + b.size * 4 + B * H * 4,
    )

    kernel = functools.partial(graph_feature_kernel, n_node=N, hidden=H)
    return pl.pallas_call(
        kernel,
        out_shape=jax.ShapeDtypeStruct((B, H), jnp.float32),
        grid=(num_tiles,),
        in_specs=[
            pl.BlockSpec((rows_per_tile, D), lambda i: (i, 0)),   # x rows for block_b graphs
            pl.BlockSpec((D, 2 * H), lambda i: (0, 0)),           # fused weight, resident
            pl.BlockSpec((1, 2 * H), lambda i: (0, 0)),           # fused bias, resident
        ],
        out_specs=pl.BlockSpec((block_b, H), lambda i: (i, 0)),
        compiler_params=pltpu.CompilerParams(
            dimension_semantics=("parallel",),   # batch tiles shard across v7x's 2 TCs
            vmem_limit_bytes=32 * 1024 * 1024,
        ),
        cost_estimate=cost,
    )(x_flat, w, b)


def reference(x, wi, bi, wj, bj, matmul_dtype=jnp.float32):
    xc = x.astype(matmul_dtype)
    zi = jnp.einsum("bnd,dh->bnh", xc, wi.astype(matmul_dtype),
                    preferred_element_type=jnp.float32) + bi
    zj = jnp.einsum("bnd,dh->bnh", xc, wj.astype(matmul_dtype),
                    preferred_element_type=jnp.float32) + bj
    return jnp.tanh((jax.nn.sigmoid(zi) * jnp.tanh(zj)).sum(axis=1))


if __name__ == "__main__":
    # Module hyperparameters (consistent with GraphFeature's forward).
    hidden_dim, n_node, n_anno = 32, 8, 4
    d_in = hidden_dim + n_anno

    key = jax.random.PRNGKey(0)
    kx, kwi, kbi, kwj, kbj, kx2 = jax.random.split(key, 6)

    # Deterministic synthetic Linear params (stored pre-transposed: [D_in, H]).
    scale = 1.0 / jnp.sqrt(jnp.float32(d_in))
    wi = jax.random.uniform(kwi, (d_in, hidden_dim), jnp.float32, -scale, scale)
    bi = jax.random.uniform(kbi, (1, hidden_dim), jnp.float32, -scale, scale)
    wj = jax.random.uniform(kwj, (d_in, hidden_dim), jnp.float32, -scale, scale)
    bj = jax.random.uniform(kbj, (1, hidden_dim), jnp.float32, -scale, scale)

    # 1) Module-default small shape (batch=2). Force the Pallas path so the
    #    kernel itself is exercised (auto-dispatch would hand this to XLA).
    x_small = jax.random.normal(kx, (2, n_node, d_in), dtype=jnp.float32)
    out_small = graph_feature(x_small, wi, bi, wj, bj, use_pallas=True)
    jax.block_until_ready(out_small)
    assert out_small.shape == (2, hidden_dim)
    ref_small_bf16 = reference(x_small, wi, bi, wj, bj, matmul_dtype=jnp.bfloat16)
    assert jnp.allclose(out_small, ref_small_bf16, atol=2e-3, rtol=2e-3), \
        "small batch: mismatch vs bf16-matched reference"
    assert jnp.allclose(out_small, reference(x_small, wi, bi, wj, bj),
                        atol=3e-2, rtol=3e-2), "small batch: mismatch vs f32 reference"

    # 2) Larger (still small) batch: exercises the multi-tile grid (2 tiles ->
    #    both v7x TCs get work) and the ragged last tile (100 graphs, 56-graph
    #    tiles) handled by Pallas padded-block semantics -- no wrapper pad.
    x_big = jax.random.normal(kx2, (100, n_node, d_in), dtype=jnp.float32)
    out_big = graph_feature(x_big, wi, bi, wj, bj)
    jax.block_until_ready(out_big)
    assert out_big.shape == (100, hidden_dim)
    ref_big_bf16 = reference(x_big, wi, bi, wj, bj, matmul_dtype=jnp.bfloat16)
    assert jnp.allclose(out_big, ref_big_bf16, atol=2e-3, rtol=2e-3), \
        "large batch: mismatch vs bf16-matched reference"
    assert jnp.allclose(out_big, reference(x_big, wi, bi, wj, bj),
                        atol=3e-2, rtol=3e-2), "large batch: mismatch vs f32 reference"

    print("KERNEL_OK")
</pallas_src>

<mosaic_0001>
module attributes {stable_mosaic.version = 11 : i64} {
  func.func @graph_feature_kernel(%arg0: i32, %arg1: memref<16x36xf32, #tpu.memory_space<vmem>>, %arg2: memref<36x64xbf16, #tpu.memory_space<vmem>>, %arg3: memref<1x64xf32, #tpu.memory_space<vmem>>, %arg4: memref<2x32xf32, #tpu.memory_space<vmem>>) attributes {dimension_semantics = [#tpu.dimension_semantics<parallel>], iteration_bounds = array<i64: 1>, scalar_prefetch = 0 : i64, scratch_operands = 0 : i64, tpu.core_type = #tpu.core_type<tc>, window_params = [{transform_indices = @transform_0, window_bounds = array<i64: 16, 36>}, {pipeline_mode = #tpu.pipeline_mode<synchronous>, transform_indices = @transform_1, window_bounds = array<i64: 36, 64>}, {pipeline_mode = #tpu.pipeline_mode<synchronous>, transform_indices = @transform_2, window_bounds = array<i64: 1, 64>}, {transform_indices = @transform_3, window_bounds = array<i64: 2, 32>}]} {
    %c0 = arith.constant 0 : index
    %c0_0 = arith.constant 0 : index
    %0 = vector.load %arg1[%c0, %c0_0] : memref<16x36xf32, #tpu.memory_space<vmem>>, vector<16x36xf32>
    %1 = arith.truncf %0 : vector<16x36xf32> to vector<16x36xbf16>
    %c0_1 = arith.constant 0 : index
    %c0_2 = arith.constant 0 : index
    %2 = vector.load %arg2[%c0_1, %c0_2] : memref<36x64xbf16, #tpu.memory_space<vmem>>, vector<36x64xbf16>
    %cst = arith.constant dense<0.000000e+00> : vector<16x64xf32>
    %3 = tpu.matmul %1, %2, %cst {dimension_numbers = #tpu.dot_dimension_numbers<[1], [0], [0], [1], [0, 0, 1, 1], [], []>} : vector<16x36xbf16>, vector<36x64xbf16>, vector<16x64xf32> -> vector<16x64xf32>
    %c0_3 = arith.constant 0 : index
    %c0_4 = arith.constant 0 : index
    %4 = vector.load %arg3[%c0_3, %c0_4] : memref<1x64xf32, #tpu.memory_space<vmem>>, vector<1x64xf32>
    %5 = vector.broadcast %4 : vector<1x64xf32> to vector<16x64xf32>
    %6 = arith.addf %3, %5 : vector<16x64xf32>
    %7 = vector.extract_strided_slice %6 {offsets = [0, 0], sizes = [16, 32], strides = [1, 1]} : vector<16x64xf32> to vector<16x32xf32>
    %8 = arith.negf %7 : vector<16x32xf32>
    %9 = math.exp %8 : vector<16x32xf32>
    %cst_5 = arith.constant 1.000000e+00 : f32
    %10 = vector.broadcast %cst_5 : f32 to vector<16x32xf32>
    %11 = arith.addf %10, %9 : vector<16x32xf32>
    %12 = arith.divf %10, %11 : vector<16x32xf32>
    %13 = vector.extract_strided_slice %6 {offsets = [0, 32], sizes = [16, 32], strides = [1, 1]} : vector<16x64xf32> to vector<16x32xf32>
    %14 = math.tanh %13 : vector<16x32xf32>
    %15 = arith.mulf %12, %14 : vector<16x32xf32>
    %16 = vector.shape_cast %15 : vector<16x32xf32> to vector<2x8x32xf32>
    %cst_6 = arith.constant dense<0.000000e+00> : vector<2x32xf32>
    %17 = vector.multi_reduction <add>, %16, %cst_6 [1] : vector<2x8x32xf32> to vector<2x32xf32>
    %18 = math.tanh %17 : vector<2x32xf32>
    %c0_7 = arith.constant 0 : index
    %c0_8 = arith.constant 0 : index
    %19 = vector.load %arg4[%c0_7, %c0_8] : memref<2x32xf32, #tpu.memory_space<vmem>>, vector<2x32xf32>
    tpu.vector_store %arg4[%c0_7, %c0_8], %18 {strides = array<i32>} : memref<2x32xf32, #tpu.memory_space<vmem>>, vector<2x32xf32>,
    return
  }
  func.func @transform_0(%arg0: i32) -> (i32, i32) {
    %c0_i32 = arith.constant 0 : i32
    %c0_i32_0 = arith.constant 0 : i32
    return %arg0, %c0_i32 : i32, i32
  }
  func.func @transform_1(%arg0: i32) -> (i32, i32) {
    %c0_i32 = arith.constant 0 : i32
    %c0_i32_0 = arith.constant 0 : i32
    %c0_i32_1 = arith.constant 0 : i32
    return %c0_i32, %c0_i32_0 : i32, i32
  }
  func.func @transform_2(%arg0: i32) -> (i32, i32) {
    %c0_i32 = arith.constant 0 : i32
    %c0_i32_0 = arith.constant 0 : i32
    %c0_i32_1 = arith.constant 0 : i32
    return %c0_i32, %c0_i32_0 : i32, i32
  }
  func.func @transform_3(%arg0: i32) -> (i32, i32) {
    %c0_i32 = arith.constant 0 : i32
    %c0_i32_0 = arith.constant 0 : i32
    return %arg0, %c0_i32 : i32, i32
  }
}

</mosaic_0001>

<llo_original>
// kernel: tpu_custom_call.1
$region0: #{tpu_custom_call.1}
  #allocation0 [shape = 'u32[]', space=smem, size = 0x4, offset = 0x4, fixed_abs, tag = 'smem constant byte address 0x4 - core index']
  #allocation1 [shape = 'u32[144,128]{1,0:T(1,128)}', space=vmem, size = 0x12000, scoped, tag = 'internal scratch']
  %s0 = inlined_call_operand.hbm [shape: f32[16,36], index: 0, kind: input, shape index: {}]
  %s1 = inlined_call_operand.hbm [shape: bf16[36,64], index: 1, kind: input, shape index: {}]
  %s2 = inlined_call_operand.vmem [shape: f32[1,64], index: 2, kind: input, shape index: {}]
  %s3 = inlined_call_operand.hbm [shape: f32[2,32], index: 3, kind: output, shape index: {}]
  %s4 = sld [smem:[#allocation0]]
  $region30: #{tpu_custom_call.1} parent=0
    _
  %s6 = ssub.s32 1, %s4
  %s7 = scalar_select 0, %s6, %s4
  $region1: #{tpu_custom_call.1} parent=0
    #allocation2 [shape = 'u8[8192]{0}', space=vmem, size = 0x2000, scoped, tag = 'input window, operand 0, single buffered']
    #allocation3 [shape = 's32[1]{0}', space=sflag, size = 0x4, scoped, tag = 'scoped memory for tpu_custom_call.1']
    #allocation4 [shape = 's32[1]{0}', space=sflag, size = 0x4, scoped, tag = 'scoped memory for tpu_custom_call.1']
    #allocation5 [shape = 'u8[10240]{0}', space=vmem, size = 0x2800, scoped, tag = 'input window, operand 1, single buffered']
    #allocation6 [shape = 's32[1]{0}', space=sflag, size = 0x4, scoped, tag = 'scoped memory for tpu_custom_call.1']
    #allocation7 [shape = 'u8[1024]{0}', space=vmem, size = 0x400, scoped, tag = 'output window, operand 0, single buffered']
    %8 = vsyncpa [#allocation3], 0
    %9 = vsyncpa [#allocation6], 0
    %10 = vsyncpa [#allocation4], 0
    // Predicated region
    $region2: #{tpu_custom_call.1} parent=1 // pred_check
      _
    $region3: #{tpu_custom_call.1} parent=1 // pred_check_branch
      %12 = sbr.rel (0) target = $region5
    $region4: #{tpu_custom_call.1} parent=1 // pred_region
      %s14 = ssub.s32 256, 256
      %15 = vsyncadd [#allocation3], %s14
      %s16 = sshll.u32 [#allocation2], 4
      %s17 = int_to_ptr.vmem [resolvable:$true] %s16
      %22 = dma.hbm_to_vmem [thread:$0]  %s0, 256, %s17, [#allocation3], 128, 128, 8
    $region5: #{tpu_custom_call.1} parent=1 // pred_fallthru
      _
    // Predicated region
    $region6: #{tpu_custom_call.1} parent=1 // pred_check
      _
    $region7: #{tpu_custom_call.1} parent=1 // pred_check_branch
      %24 = sbr.rel (0) target = $region9
    $region8: #{tpu_custom_call.1} parent=1 // pred_region
      %s26 = ssub.s32 320, 320
      %27 = vsyncadd [#allocation6], %s26
      %s28 = sshll.u32 [#allocation5], 4
      %s29 = int_to_ptr.vmem [resolvable:$true] %s28
      %34 = dma.hbm_to_vmem [thread:$0]  %s1, 320, %s29, [#allocation6], 64, 64, 4
    $region9: #{tpu_custom_call.1} parent=1 // pred_fallthru
      _
    // Predicated region
    $region10: #{tpu_custom_call.1} parent=1 // pred_check
      _
    $region11: #{tpu_custom_call.1} parent=1 // pred_check_branch
      %36 = sbr.rel (0) target = $region13
    $region12: #{tpu_custom_call.1} parent=1 // pred_region
      _
    $region13: #{tpu_custom_call.1} parent=1 // pred_fallthru
      _
    // Predicated region
    $region14: #{tpu_custom_call.1} parent=1 // pred_check
      _
    $region15: #{tpu_custom_call.1} parent=1 // pred_check_branch
      %38 = sbr.rel (0) target = $region17
    $region16: #{tpu_custom_call.1} parent=1 // pred_region
      %39 = dma.done [#allocation3], 256
    $region17: #{tpu_custom_call.1} parent=1 // pred_fallthru
      _
    // Predicated region
    $region18: #{tpu_custom_call.1} parent=1 // pred_check
      _
    $region19: #{tpu_custom_call.1} parent=1 // pred_check_branch
      %41 = sbr.rel (0) target = $region21
    $region20: #{tpu_custom_call.1} parent=1 // pred_region
      %42 = dma.done [#allocation6], 320
    $region21: #{tpu_custom_call.1} parent=1 // pred_fallthru
      _
    %v44 = vld [vmem:[#allocation2] sm:$0xff]
    %v45 = vld [vmem:[#allocation2 + $0x8] sm:$0xff]
    %v46 = vpack.c.bf16 %v45, %v44
    %v47 = vld [vmem:[#allocation5] sm:$0xf]
    %v48 = vld [vmem:[#allocation5 + $0x4] sm:$0xf]
    %v49 = vld [vmem:[#allocation5 + $0x8] sm:$0xf]
    %v50 = vld [vmem:[#allocation5 + $0xc] sm:$0xf]
    %v51 = vld [vmem:[#allocation5 + $0x10] sm:$0x3]
    %v52 = vld [vmem:[%s2] sm:$0x1]
    %v54 = vlaneseq
    %v55 = vshrl.u32 %v54, 7
    %v56 = vsub.s32 0, %v55
    %v57 = vrot.slane %v52, %v56
    %v64 = vunpack.c.l.b16 %v47
    %v65 = vunpack.c.l.b16 %v48
    %v66 = vunpack.c.l.b16 %v49
    %v67 = vunpack.c.l.b16 %v50
    %v68 = vunpack.c.l.b16 %v51
    %v69 = vpack.c.b16 %v65, %v64
    %v70 = vpack.c.b16 %v67, %v66
    %v71 = vpack.c.b16 %v68, %v68
    %vm74 = vcmask 293888
    %v76 = vsel %vm74, %v46, 0
    %vm78 = vcmask 1041408
    %v80 = vsel %vm78, %v71, 0
    %82 = vmatprep.subr.bf16.mxu0 0
    %83 = vmatpush1.bf16.msra.mxu0 %v69
    %84 = vmatprep.subr.bf16.mxu0 0
    %85 = vmatpush1.bf16.msra.mxu0 %v70
    %86 = vmatprep.subr.bf16.mxu0 0
    %87 = vmatpush1.bf16.msra.mxu0 %v80
    %88 = vmatprep.subr.bf16.mxu0 0
    %89 = vmatpush1.bf16.msra.mxu0 0
    %90 = vmatprep.subr.bf16.mxu0 0
    %91 = vmatpush1.bf16.msra.mxu0 0
    %92 = vmatprep.subr.bf16.mxu0 0
    %93 = vmatpush1.bf16.msra.mxu0 0
    %94 = vmatprep.subr.bf16.mxu0 0
    %95 = vmatpush1.bf16.msra.mxu0 0
    %96 = vmatprep.subr.bf16.mxu0 0
    %97 = vmatpush1.bf16.msra.mxu0 0
    %98 = vmatprep.subr.bf16.mxu0 0
    %99 = vmatpush1.bf16.msra.mxu0 0
    %100 = vmatprep.subr.bf16.mxu0 0
    %101 = vmatpush1.bf16.msra.mxu0 0
    %102 = vmatprep.subr.bf16.mxu0 0
    %103 = vmatpush1.bf16.msra.mxu0 0
    %104 = vmatprep.subr.bf16.mxu0 0
    %105 = vmatpush1.bf16.msra.mxu0 0
    %106 = vmatprep.subr.bf16.mxu0 0
    %107 = vmatpush1.bf16.msra.mxu0 0
    %108 = vmatprep.subr.bf16.mxu0 0
    %109 = vmatpush1.bf16.msra.mxu0 0
    %110 = vmatprep.subr.bf16.mxu0 0
    %111 = vmatpush1.bf16.msra.mxu0 0
    %112 = vmatprep.subr.bf16.mxu0 0
    %113 = vmatpush1.bf16.msra.mxu0 0
    %114 = vmatprep.mubr.bf16.mxu0 0
    %115 = vmatmul.mubr.bf16.gmra.mrb[0].mxu0 %v76
    %v116 = vpop.f32.mrb[0].mxu0
    %v117 = vadd.f32 %v57, %v116
    %v118 = vpop.f32.mrb[0].mxu0
    %v119 = vpop.f32.mrb[0].mxu0
    %v120 = vadd.f32 %v57, %v119
    %v121 = vpop.f32.mrb[0].mxu0
    %122 = vdwg.mxu0
    %v123 = vxor.u32 %v117, 2147483648
    %v124 = vxor.u32 %v120, 2147483648
    %v125 = vmul.f32 %v123, 1.442695
    %v126 = vpow.pop %v125
    %v127 = vmul.f32 %v124, 1.442695
    %v128 = vpow.pop %v127
    %v129 = vadd.f32 %v126, 1.0
    %v130 = vadd.f32 %v128, 1.0
    %v131 = vrcp.pop %v129
    %v132 = vmul.f32 1.0, %v131
    %v133 = vrcp.pop %v130
    %v134 = vmul.f32 1.0, %v133
    %v135 = vtanh.pop %v117
    %v136 = vtanh.pop %v120
    %139 = vrot.lane.b32.xlu0 %v135, 96
    %v140 = vpop.permute.xlu0 %139
    %141 = vrot.lane.b32.xlu0 %v136, 96
    %v142 = vpop.permute.xlu0 %141
    %v145 = vmul.f32 %v132, %v140
    %v146 = vmul.f32 %v134, %v142
    %vm147 = vcmask 261120
    %v148 = vsel %vm147, %v145, 0.0
    %v149 = vrot.slane %v148, 4
    %v150 = vadd.f32 %v148, %v149
    %v151 = vrot.slane %v150, 2
    %v152 = vadd.f32 %v150, %v151
    %v153 = vrot.slane %v152, 1
    %v154 = vadd.f32 %v152, %v153
    %v155 = vsel %vm147, %v146, 0.0
    %v156 = vrot.slane %v155, 4
    %v157 = vadd.f32 %v155, %v156
    %v158 = vrot.slane %v157, 2
    %v159 = vadd.f32 %v157, %v158
    %v160 = vrot.slane %v159, 1
    %v161 = vadd.f32 %v159, %v160
    %v162 = vtanh.pop %v154
    %v163 = vtanh.pop %v161
    %vm166 = vcmask 1041409
    %v167 = vsel %vm166, %v163, %v162
    %vm169 = vcmask 254976
    %170 = vst.msk [vmem:[#allocation7] sm:$0x3] %vm169, %v167
    // Predicated region
    $region22: #{tpu_custom_call.1} parent=1 // pred_check
      _
    $region23: #{tpu_custom_call.1} parent=1 // pred_check_branch
      %172 = sbr.rel (0) target = $region25
    $region24: #{tpu_custom_call.1} parent=1 // pred_region
      %s174 = ssub.s32 32, 32
      %175 = vsyncadd [#allocation4], %s174
      %s177 = sshll.u32 [#allocation7], 4
      %s178 = int_to_ptr.vmem [resolvable:$true] %s177
      %180 = dma.vmem_to_hbm [thread:$0]  %s178, 32, %s3, [#allocation4]
    $region25: #{tpu_custom_call.1} parent=1 // pred_fallthru
      _
    // Predicated region
    $region26: #{tpu_custom_call.1} parent=1 // pred_check
      _
    $region27: #{tpu_custom_call.1} parent=1 // pred_check_branch
      %182 = sbr.rel (0) target = $region29
    $region28: #{tpu_custom_call.1} parent=1 // pred_region
      %183 = dma.done [#allocation4], 32
    $region29: #{tpu_custom_call.1} parent=1 // pred_fallthru
      _
    %184 = vsyncpa [#allocation3], 1
    %185 = vsyncpa [#allocation6], 1
    %186 = vsyncpa [#allocation4], 1

</llo_original>
